<compile_context>
chip_gen: v6e
topology: v6e:2x2x1
jax: 0.10.0
libtpu: 0.0.40
codegen_flags: <defaults>
</compile_context>

<pallas_src>
import jax
import jax.numpy as jnp
from jax import lax
from jax.experimental import pallas as pl
from jax.experimental.pallas import tpu as pltpu


# ---------------------------------------------------------------------------
# Kernels
# ---------------------------------------------------------------------------

def _logreg_kernel_t(x_ref, w_ref, b_ref, o_ref):
    """Lane-dense (transposed-output) path, D_out < 128.

    x_ref: [TM, D_in] (compute dtype)      w_ref: [D_out, D_in] (torch layout)
    b_ref: [D_out, 1] f32                  o_ref: [D_out, TM]   (lane-dense store)
    """
    # w · x^T  (contract both last dims) -> [D_out, TM]; f32 MXU accumulation.
    # The weight feed is native LHS [M, K]; the x-tile shuffle goes to the XLU,
    # a slot that is idle on this store/HBM-bound kernel.
    z_t = lax.dot_general(
        w_ref[...], x_ref[...],
        dimension_numbers=(((1,), (1,)), ((), ())),
        preferred_element_type=jnp.float32,
    )
    z_t = z_t + b_ref[...]                       # bias broadcast over batch lanes
    o_ref[...] = jax.nn.sigmoid(z_t).astype(o_ref.dtype)


def _logreg_kernel(x_ref, wt_ref, b_ref, o_ref):
    """Standard path, D_out >= 128 (output already lane-dense).

    x_ref: [TM, D_in]   wt_ref: [D_in, D_out] (pre-transposed)   b_ref: [1, D_out]
    """
    z = lax.dot_general(
        x_ref[...], wt_ref[...],
        dimension_numbers=(((1,), (0,)), ((), ())),   # native [M,K] x [K,N]
        preferred_element_type=jnp.float32,
    )
    z = z + b_ref[...]
    o_ref[...] = jax.nn.sigmoid(z).astype(o_ref.dtype)


# ---------------------------------------------------------------------------
# Tiling / VMEM helpers
# ---------------------------------------------------------------------------

def _round_up(a, m):
    return ((a + m - 1) // m) * m


def _vmem_caps():
    """(scoped vmem limit, working-set budget) derived from the actual chip."""
    cap = 64 << 20                      # conservative default: v7x per-TC VMEM
    try:
        cap = int(pltpu.get_tpu_info().vmem_capacity_bytes)
    except Exception:
        pass
    limit = max(32 << 20, min(cap - (8 << 20), 100 << 20))   # compiler headroom
    budget = (limit * 3) // 4                                 # working-set target
    return int(limit), int(budget)


def _pick_tm(batch, d_in, d_out, compute_bytes, out_bytes, budget_bytes):
    """Largest balanced batch tile fitting the VMEM working-set budget.

    Counts double buffers for EVERY input/output block (Pallas double-buffers
    the 'resident' weight/bias too), the f32 z intermediate, and the MXU-feed
    transpose copy of the x tile.
    """
    fixed = 2 * d_out * d_in * compute_bytes + 2 * max(d_out * 4, 4096)
    per_row = (2 * d_in * compute_bytes        # x tile, double buffered
               + d_in * compute_bytes          # MXU-feed transpose copy of x tile
               + 2 * d_out * out_bytes         # out tile, double buffered
               + 2 * d_out * 4)                # f32 z / sigmoid temporaries
    avail = budget_bytes - fixed
    if avail < per_row * 8:
        # TODO(synk): add a K (D_in) reduction grid axis with a VMEM accumulator
        # (pl.when init/finalize) when the resident weight alone overflows VMEM.
        raise NotImplementedError(
            "weight too large for the resident-weight kernel; needs a K-tiled variant")
    tm_max = min(avail // per_row, 8192)
    if batch <= tm_max:
        return int(batch)              # single full-batch tile (no (8,128) rule)
    if tm_max < 128:
        raise NotImplementedError(
            "per-row VMEM footprint too large for a 128-row tile; needs K/N tiling")
    # Balanced, even number of tiles (keeps both v7x TensorCores busy); tiles a
    # multiple of 128 so batch-lane stores are unmasked and (8,128)-legal.
    n_tiles = -(-batch // tm_max)
    if n_tiles % 2:
        n_tiles += 1
    tm = _round_up(-(-batch // n_tiles), 128)
    tm = min(tm, (tm_max // 128) * 128)
    return int(max(tm, 128))


# ---------------------------------------------------------------------------
# Wrapper
# ---------------------------------------------------------------------------

def simple_logistic_regression(x, weight, bias, *, tm=None,
                               compute_dtype=jnp.bfloat16):
    """sigmoid(x @ weight.T + bias).

    x: [B, D_in], weight: [D_out, D_in] (torch nn.Linear layout), bias: [D_out].
    """
    B, D_in = x.shape
    D_out = weight.shape[0]
    out_dtype = x.dtype

    vmem_limit, budget = _vmem_caps()
    cb = jnp.dtype(compute_dtype).itemsize
    ob = jnp.dtype(out_dtype).itemsize

    if tm is None:
        tm = _pick_tm(B, D_in, D_out, cb, ob, budget)
    else:
        tm = int(min(tm, B))
        if tm < B:
            assert tm % 128 == 0, "explicit tm must be a multiple of 128 when tiling"
    n_tiles = pl.cdiv(B, tm)

    xc = x.astype(compute_dtype)
    wc = weight.astype(compute_dtype)
    bias_f32 = bias.astype(jnp.float32)

    cost = pl.CostEstimate(
        flops=2 * B * D_in * D_out,
        transcendentals=B * D_out,
        bytes_accessed=B * D_in * cb + D_out * D_in * cb + D_out * 4 + B * D_out * ob,
    )

    # Deepen the x pipeline when tiles are tiny (latency-exposed DMAs).
    if n_tiles > 1 and tm * D_in * cb <= (1 << 20):
        x_spec = pl.BlockSpec((tm, D_in), lambda i: (i, 0),
                              pipeline_mode=pl.Buffered(3))
    else:
        x_spec = pl.BlockSpec((tm, D_in), lambda i: (i, 0))

    cparams = pltpu.CompilerParams(
        # TODO(synk): verify "parallel" shards the batch axis across both v7x
        # TensorCores; switch to pltpu.CORE_PARALLEL if it does not.
        dimension_semantics=("parallel",),
        vmem_limit_bytes=int(vmem_limit),
    )

    if D_out < 128:
        # Lane-dense transposed-output path: store [D_out, TM] blocks (lane dim
        # = batch tile), undo the transpose on the tiny result in the wrapper.
        out_t = pl.pallas_call(
            _logreg_kernel_t,
            out_shape=jax.ShapeDtypeStruct((D_out, B), out_dtype),
            grid=(n_tiles,),
            in_specs=[
                x_spec,                                            # streamed batch
                pl.BlockSpec((D_out, D_in), lambda i: (0, 0)),     # weight (torch layout)
                pl.BlockSpec((D_out, 1), lambda i: (0, 0)),        # bias column
            ],
            out_specs=pl.BlockSpec((D_out, tm), lambda i: (0, i)),
            compiler_params=cparams,
            cost_estimate=cost,
        )(xc, wc, bias_f32.reshape(D_out, 1))
        return out_t.T                                             # [B, D_out]

    # Standard path: one-time wrapper weight transpose -> native MXU feed.
    return pl.pallas_call(
        _logreg_kernel,
        out_shape=jax.ShapeDtypeStruct((B, D_out), out_dtype),
        grid=(n_tiles,),
        in_specs=[
            x_spec,
            pl.BlockSpec((D_in, D_out), lambda i: (0, 0)),         # weight.T resident
            pl.BlockSpec((1, D_out), lambda i: (0, 0)),            # bias row
        ],
        out_specs=pl.BlockSpec((tm, D_out), lambda i: (i, 0)),
        compiler_params=cparams,
        cost_estimate=cost,
    )(xc, wc.T, bias_f32.reshape(1, D_out))


# ---------------------------------------------------------------------------
# Demo / correctness check
# ---------------------------------------------------------------------------

if __name__ == "__main__":
    key = jax.random.PRNGKey(0)
    kx, kw, kb, kx2 = jax.random.split(key, 4)

    batch, input_dim, output_dim = 8, 32, 4

    x = jax.random.normal(kx, (batch, input_dim), dtype=jnp.float32)
    # Deterministic init mimicking nn.Linear's uniform(-1/sqrt(fan_in), 1/sqrt(fan_in)).
    bound = 1.0 / float(input_dim) ** 0.5
    weight = jax.random.uniform(kw, (output_dim, input_dim),
                                minval=-bound, maxval=bound, dtype=jnp.float32)
    bias = jax.random.uniform(kb, (output_dim,),
                              minval=-bound, maxval=bound, dtype=jnp.float32)

    ref = jax.nn.sigmoid(x @ weight.T + bias)

    # f32 compute path: tight check against the torch-equivalent reference.
    out_f32 = simple_logistic_regression(x, weight, bias, compute_dtype=jnp.float32)
    jax.block_until_ready(out_f32)
    assert out_f32.shape == (batch, output_dim)
    assert jnp.allclose(out_f32, ref, atol=1e-5, rtol=1e-5)

    # Default bf16-input path (HBM-bound x stream halved); sigmoid is bounded so
    # the absolute error from bf16 input rounding stays tiny.
    out_bf16 = simple_logistic_regression(x, weight, bias)
    jax.block_until_ready(out_bf16)
    assert jnp.allclose(out_bf16, ref, atol=5e-3, rtol=0.0)

    # Multi-tile path: forced small tile exercises batch streaming, the deeper
    # Buffered(3) x pipeline, and the lane-dense transposed store/grid indexing.
    B2 = 512
    x2 = jax.random.normal(kx2, (B2, input_dim), dtype=jnp.float32)
    ref2 = jax.nn.sigmoid(x2 @ weight.T + bias)
    out2 = simple_logistic_regression(x2, weight, bias, tm=128)
    jax.block_until_ready(out2)
    assert out2.shape == (B2, output_dim)
    assert jnp.allclose(out2, ref2, atol=5e-3, rtol=0.0)

    print("KERNEL_OK")
</pallas_src>

<mosaic_0001>
module attributes {stable_mosaic.version = 11 : i64} {
  func.func @_logreg_kernel_t(%arg0: i32, %arg1: memref<8x32xf32, #tpu.memory_space<vmem>>, %arg2: memref<4x32xf32, #tpu.memory_space<vmem>>, %arg3: memref<4x1xf32, #tpu.memory_space<vmem>>, %arg4: memref<4x8xf32, #tpu.memory_space<vmem>>) attributes {dimension_semantics = [#tpu.dimension_semantics<parallel>], iteration_bounds = array<i64: 1>, scalar_prefetch = 0 : i64, scratch_operands = 0 : i64, tpu.core_type = #tpu.core_type<tc>, window_params = [{transform_indices = @transform_0, window_bounds = array<i64: 8, 32>}, {pipeline_mode = #tpu.pipeline_mode<synchronous>, transform_indices = @transform_1, window_bounds = array<i64: 4, 32>}, {pipeline_mode = #tpu.pipeline_mode<synchronous>, transform_indices = @transform_2, window_bounds = array<i64: 4, 1>}, {transform_indices = @transform_3, window_bounds = array<i64: 4, 8>}]} {
    %c0 = arith.constant 0 : index
    %c0_0 = arith.constant 0 : index
    %0 = vector.load %arg2[%c0, %c0_0] : memref<4x32xf32, #tpu.memory_space<vmem>>, vector<4x32xf32>
    %c0_1 = arith.constant 0 : index
    %c0_2 = arith.constant 0 : index
    %1 = vector.load %arg1[%c0_1, %c0_2] : memref<8x32xf32, #tpu.memory_space<vmem>>, vector<8x32xf32>
    %cst = arith.constant dense<0.000000e+00> : vector<4x8xf32>
    %2 = tpu.matmul %0, %1, %cst {dimension_numbers = #tpu.dot_dimension_numbers<[1], [1], [0], [0], [0, 0, 1, 0], [], []>} : vector<4x32xf32>, vector<8x32xf32>, vector<4x8xf32> -> vector<4x8xf32>
    %c0_3 = arith.constant 0 : index
    %c0_4 = arith.constant 0 : index
    %3 = vector.load %arg3[%c0_3, %c0_4] : memref<4x1xf32, #tpu.memory_space<vmem>>, vector<4x1xf32>
    %4 = vector.broadcast %3 : vector<4x1xf32> to vector<4x8xf32>
    %5 = arith.addf %2, %4 : vector<4x8xf32>
    %6 = arith.negf %5 : vector<4x8xf32>
    %7 = math.exp %6 : vector<4x8xf32>
    %cst_5 = arith.constant 1.000000e+00 : f32
    %8 = vector.broadcast %cst_5 : f32 to vector<4x8xf32>
    %9 = arith.addf %8, %7 : vector<4x8xf32>
    %10 = arith.divf %8, %9 : vector<4x8xf32>
    %c0_6 = arith.constant 0 : index
    %c0_7 = arith.constant 0 : index
    %11 = vector.load %arg4[%c0_6, %c0_7] : memref<4x8xf32, #tpu.memory_space<vmem>>, vector<4x8xf32>
    tpu.vector_store %arg4[%c0_6, %c0_7], %10 {strides = array<i32>} : memref<4x8xf32, #tpu.memory_space<vmem>>, vector<4x8xf32>,
    return
  }
  func.func @transform_0(%arg0: i32) -> (i32, i32) {
    %c0_i32 = arith.constant 0 : i32
    %c0_i32_0 = arith.constant 0 : i32
    return %arg0, %c0_i32 : i32, i32
  }
  func.func @transform_1(%arg0: i32) -> (i32, i32) {
    %c0_i32 = arith.constant 0 : i32
    %c0_i32_0 = arith.constant 0 : i32
    %c0_i32_1 = arith.constant 0 : i32
    return %c0_i32, %c0_i32_0 : i32, i32
  }
  func.func @transform_2(%arg0: i32) -> (i32, i32) {
    %c0_i32 = arith.constant 0 : i32
    %c0_i32_0 = arith.constant 0 : i32
    %c0_i32_1 = arith.constant 0 : i32
    return %c0_i32, %c0_i32_0 : i32, i32
  }
  func.func @transform_3(%arg0: i32) -> (i32, i32) {
    %c0_i32 = arith.constant 0 : i32
    %c0_i32_0 = arith.constant 0 : i32
    return %c0_i32, %arg0 : i32, i32
  }
}

</mosaic_0001>

<llo_original>
// kernel: tpu_custom_call.1
$region0: #{tpu_custom_call.1}
  #allocation0 [shape = 'u32[]', space=smem, size = 0x4, offset = 0x4, fixed_abs, tag = 'smem constant byte address 0x4 - core index']
  #allocation1 [shape = 'u32[144,128]{1,0:T(1,128)}', space=vmem, size = 0x12000, scoped, tag = 'internal scratch']
  %s0 = inlined_call_operand.hbm [shape: f32[8,32], index: 0, kind: input, shape index: {}]
  %s1 = inlined_call_operand.vmem [shape: f32[4,32], index: 1, kind: input, shape index: {}]
  %s2 = inlined_call_operand.vmem [shape: f32[4,1], index: 2, kind: input, shape index: {}]
  %s3 = inlined_call_operand.hbm [shape: f32[4,8], index: 3, kind: output, shape index: {}]
  %s4 = sld [smem:[#allocation0]]
  $region26: #{tpu_custom_call.1} parent=0
    _
  %s6 = ssub.s32 1, %s4
  %s7 = scalar_select 0, %s6, %s4
  $region1: #{tpu_custom_call.1} parent=0
    #allocation2 [shape = 'u8[4096]{0}', space=vmem, size = 0x1000, scoped, tag = 'input window, operand 0, single buffered']
    #allocation3 [shape = 's32[1]{0}', space=sflag, size = 0x4, scoped, tag = 'scoped memory for tpu_custom_call.1']
    #allocation4 [shape = 's32[1]{0}', space=sflag, size = 0x4, scoped, tag = 'scoped memory for tpu_custom_call.1']
    #allocation5 [shape = 'u8[2048]{0}', space=vmem, size = 0x800, scoped, tag = 'output window, operand 0, single buffered']
    %8 = vsyncpa [#allocation3], 0
    %9 = vsyncpa [#allocation4], 0
    // Predicated region
    $region2: #{tpu_custom_call.1} parent=1 // pred_check
      _
    $region3: #{tpu_custom_call.1} parent=1 // pred_check_branch
      %11 = sbr.rel (0) target = $region5
    $region4: #{tpu_custom_call.1} parent=1 // pred_region
      %s13 = ssub.s32 128, 128
      %14 = vsyncadd [#allocation3], %s13
      %s16 = sshll.u32 [#allocation2], 4
      %s17 = int_to_ptr.vmem [resolvable:$true] %s16
      %19 = dma.hbm_to_vmem [thread:$0]  %s0, 128, %s17, [#allocation3]
    $region5: #{tpu_custom_call.1} parent=1 // pred_fallthru
      _
    // Predicated region
    $region6: #{tpu_custom_call.1} parent=1 // pred_check
      _
    $region7: #{tpu_custom_call.1} parent=1 // pred_check_branch
      %21 = sbr.rel (0) target = $region9
    $region8: #{tpu_custom_call.1} parent=1 // pred_region
      _
    $region9: #{tpu_custom_call.1} parent=1 // pred_fallthru
      _
    // Predicated region
    $region10: #{tpu_custom_call.1} parent=1 // pred_check
      _
    $region11: #{tpu_custom_call.1} parent=1 // pred_check_branch
      %23 = sbr.rel (0) target = $region13
    $region12: #{tpu_custom_call.1} parent=1 // pred_region
      _
    $region13: #{tpu_custom_call.1} parent=1 // pred_fallthru
      _
    // Predicated region
    $region14: #{tpu_custom_call.1} parent=1 // pred_check
      _
    $region15: #{tpu_custom_call.1} parent=1 // pred_check_branch
      %25 = sbr.rel (0) target = $region17
    $region16: #{tpu_custom_call.1} parent=1 // pred_region
      %26 = dma.done [#allocation3], 128
    $region17: #{tpu_custom_call.1} parent=1 // pred_fallthru
      _
    %v27 = vld [vmem:[%s1] sm:$0xf]
    %v28 = vld [vmem:[#allocation2] sm:$0xff]
    %v29 = vld [vmem:[%s2] sm:$0xf]
    %31 = vset.pattern.permute.xlu0 0
    %32 = vperm.xlu0 %31, %v29
    %v33 = vpop.permute.xlu0 %32
    %vm35 = vcmask 261120
    %v37 = vsel %vm35, %v27, 0
    %v40 = vsel %vm35, %v28, 0
    %42 = vmatprep.subr.mxu0 0.0
    %43 = vmatpush1.xpose.msra.mxu0 0.0
    %44 = vmatprep.subr.mxu0 0.0
    %45 = vmatpush1.xpose.msra.mxu0 0.0
    %46 = vmatprep.subr.mxu0 0.0
    %47 = vmatpush1.xpose.msra.mxu0 0.0
    %48 = vmatprep.subr.mxu0 0.0
    %49 = vmatpush1.xpose.msra.mxu0 0.0
    %50 = vmatprep.subr.mxu0 0.0
    %51 = vmatpush1.xpose.msra.mxu0 0.0
    %52 = vmatprep.subr.mxu0 0.0
    %53 = vmatpush1.xpose.msra.mxu0 0.0
    %54 = vmatprep.subr.mxu0 0.0
    %55 = vmatpush1.xpose.msra.mxu0 0.0
    %56 = vmatprep.subr.mxu0 0.0
    %57 = vmatpush1.xpose.msra.mxu0 0.0
    %58 = vmatprep.subr.mxu0 0.0
    %59 = vmatpush1.xpose.msra.mxu0 0.0
    %60 = vmatprep.subr.mxu0 0.0
    %61 = vmatpush1.xpose.msra.mxu0 0.0
    %62 = vmatprep.subr.mxu0 0.0
    %63 = vmatpush1.xpose.msra.mxu0 0.0
    %64 = vmatprep.subr.mxu0 0.0
    %65 = vmatpush1.xpose.msra.mxu0 0.0
    %66 = vmatprep.subr.mxu0 0.0
    %67 = vmatpush1.xpose.msra.mxu0 0.0
    %68 = vmatprep.subr.mxu0 0.0
    %69 = vmatpush1.xpose.msra.mxu0 0.0
    %70 = vmatprep.subr.mxu0 0.0
    %71 = vmatpush1.xpose.msra.mxu0 0.0
    %72 = vmatprep.subr.mxu0 0.0
    %73 = vmatpush1.xpose.msra.mxu0 %v40
    %74 = vmatprep.subr.mxu0 0.0
    %75 = vmatpush2.xpose.msra.mxu0 0.0
    %76 = vmatprep.subr.mxu0 0.0
    %77 = vmatpush2.xpose.msra.mxu0 0.0
    %78 = vmatprep.subr.mxu0 0.0
    %79 = vmatpush2.xpose.msra.mxu0 0.0
    %80 = vmatprep.subr.mxu0 0.0
    %81 = vmatpush2.xpose.msra.mxu0 0.0
    %82 = vmatprep.subr.mxu0 0.0
    %83 = vmatpush2.xpose.msra.mxu0 0.0
    %84 = vmatprep.subr.mxu0 0.0
    %85 = vmatpush2.xpose.msra.mxu0 0.0
    %86 = vmatprep.subr.mxu0 0.0
    %87 = vmatpush2.xpose.msra.mxu0 0.0
    %88 = vmatprep.subr.mxu0 0.0
    %89 = vmatpush2.xpose.msra.mxu0 0.0
    %90 = vmatprep.subr.mxu0 0.0
    %91 = vmatpush2.xpose.msra.mxu0 0.0
    %92 = vmatprep.subr.mxu0 0.0
    %93 = vmatpush2.xpose.msra.mxu0 0.0
    %94 = vmatprep.subr.mxu0 0.0
    %95 = vmatpush2.xpose.msra.mxu0 0.0
    %96 = vmatprep.subr.mxu0 0.0
    %97 = vmatpush2.xpose.msra.mxu0 0.0
    %98 = vmatprep.subr.mxu0 0.0
    %99 = vmatpush2.xpose.msra.mxu0 0.0
    %100 = vmatprep.subr.mxu0 0.0
    %101 = vmatpush2.xpose.msra.mxu0 0.0
    %102 = vmatprep.subr.mxu0 0.0
    %103 = vmatpush2.xpose.msra.mxu0 0.0
    %104 = vmatprep.subr.mxu0 0.0
    %105 = vmatpush2.xpose.msra.mxu0 0.0
    %106 = vmatprep.mubr.f32.mxu0 0.0
    %107 = vmatmul.mubr.f32.gmra.mxu0 %v37
    %v108 = vpop.f32.mrf.mxu0
    %v109 = vadd.f32 %v33, %v108
    %v110 = vpop.f32.mrf.mxu0
    %111 = vdwg.mxu0
    %v112 = vxor.u32 %v109, 2147483648
    %v113 = vmul.f32 %v112, 1.442695
    %v114 = vpow.pop %v113
    %v115 = vadd.f32 %v114, 1.0
    %v116 = vrcp.pop %v115
    %v117 = vmul.f32 1.0, %v116
    %vm118 = vcmask 60416
    %119 = vst.msk [vmem:[#allocation5] sm:$0xf] %vm118, %v117
    // Predicated region
    $region18: #{tpu_custom_call.1} parent=1 // pred_check
      _
    $region19: #{tpu_custom_call.1} parent=1 // pred_check_branch
      %121 = sbr.rel (0) target = $region21
    $region20: #{tpu_custom_call.1} parent=1 // pred_region
      %s123 = ssub.s32 64, 64
      %124 = vsyncadd [#allocation4], %s123
      %s126 = sshll.u32 [#allocation5], 4
      %s127 = int_to_ptr.vmem [resolvable:$true] %s126
      %129 = dma.vmem_to_hbm [thread:$0]  %s127, 64, %s3, [#allocation4]
    $region21: #{tpu_custom_call.1} parent=1 // pred_fallthru
      _
    // Predicated region
    $region22: #{tpu_custom_call.1} parent=1 // pred_check
      _
    $region23: #{tpu_custom_call.1} parent=1 // pred_check_branch
      %131 = sbr.rel (0) target = $region25
    $region24: #{tpu_custom_call.1} parent=1 // pred_region
      %132 = dma.done [#allocation4], 64
    $region25: #{tpu_custom_call.1} parent=1 // pred_fallthru
      _
    %133 = vsyncpa [#allocation3], 1
    %134 = vsyncpa [#allocation4], 1

</llo_original>
